<compile_context>
chip_gen: v6e
topology: v6e:2x2x1
jax: 0.10.0
libtpu: 0.0.40
codegen_flags: <defaults>
</compile_context>

<pallas_src>
import functools

import jax
import jax.numpy as jnp
from jax.experimental import pallas as pl
from jax.experimental.pallas import tpu as pltpu

NUM_CLASS = 3          # forward() hard-codes 3 labels (bg, 1, 2)
SMOOTH = 1e-5
_LANES = 128
_MAX_TILE_ROWS = 2048  # 2048 rows x 128 lanes = 256K pixels per grid step


def _cdiv(a, b):
    return (a + b - 1) // b


def dice_loss_kernel(pred_ref, gt_ref, out_ref, *, hw, mask_needed):
    """One grid step = one (batch, pixel-row-tile) block.

    pred_ref: (C, TR, 128) logits; gt_ref: (1, TR, 128) int labels;
    out_ref:  (1, 1, 9, 128) lane partials for this block
              (rows 0..2 intersect, 3..5 pred sum, 6..8 label sum, per class).
    """
    tr = pred_ref.shape[1]

    if mask_needed:
        # Global pixel index of every (row, lane) element of this tile; pixels
        # at index >= hw are wrapper padding or out-of-bounds ragged-tile rows.
        j = pl.program_id(1)
        row = jax.lax.broadcasted_iota(jnp.int32, (tr, _LANES), 0)
        lane = jax.lax.broadcasted_iota(jnp.int32, (tr, _LANES), 1)
        valid = ((j * tr + row) * _LANES + lane) < hw
    else:
        valid = None

    # One dense (TR, 128) plane per class -> full 8x128 vreg utilization.
    p0 = pred_ref[0].astype(jnp.float32)
    p1 = pred_ref[1].astype(jnp.float32)
    p2 = pred_ref[2].astype(jnp.float32)
    g = gt_ref[0]                                        # (TR, 128) int labels

    # Numerically-stable softmax over the 3 classes, elementwise across planes.
    m = jnp.maximum(p0, jnp.maximum(p1, p2))
    e0 = jnp.exp(p0 - m)
    e1 = jnp.exp(p1 - m)
    e2 = jnp.exp(p2 - m)
    inv = pl.reciprocal(e0 + e1 + e2, approx=True)       # EUP slot; no VALU divides

    i_rows, z_rows, y_rows = [], [], []
    for c, e_c in enumerate((e0, e1, e2)):
        sm_c = e_c * inv                                 # softmax prob of class c
        hit = g == c                                     # one-hot label (bool)
        if valid is not None:
            sm_c = jnp.where(valid, sm_c, 0.0)           # nan-safe select of padding
            hit = jnp.logical_and(hit, valid)
        i_rows.append(jnp.sum(jnp.where(hit, sm_c, 0.0), axis=0, keepdims=True))
        z_rows.append(jnp.sum(sm_c, axis=0, keepdims=True))
        y_rows.append(jnp.sum(jnp.where(hit, 1.0, 0.0), axis=0, keepdims=True))

    out_ref[0, 0] = jnp.concatenate(i_rows + z_rows + y_rows, axis=0)   # (9, 128)


def dice_loss(pred, gt):
    """pred: (B, C, H, W) float logits; gt: (B, 1, H, W) int labels in {0,1,2}."""
    B, C, H, W = pred.shape
    assert C == NUM_CLASS, "forward() hard-codes 3 classes (bg, label1, label2)"
    assert gt.shape == (B, 1, H, W)
    HW = H * W
    R = _cdiv(HW, _LANES)
    HW_pad = R * _LANES

    if not jnp.issubdtype(gt.dtype, jnp.integer):
        gt = gt.astype(jnp.int32)

    # Free reshapes only — no transpose, no extra HBM pass over pred.
    pred3 = pred.reshape(B, C, HW)
    gt3 = gt.reshape(B, 1, HW)
    if HW_pad != HW:
        # Rare path: pixel count not a multiple of 128 — pad once; the padded
        # pixels are masked out inside the kernel.
        pad = HW_pad - HW
        pred3 = jnp.pad(pred3, ((0, 0), (0, 0), (0, pad)))
        gt3 = jnp.pad(gt3, ((0, 0), (0, 0), (0, pad)))
    pred4 = pred3.reshape(B, C, R, _LANES)
    gt4 = gt3.reshape(B, 1, R, _LANES)

    TR = R if R <= _MAX_TILE_ROWS else _MAX_TILE_ROWS   # TR == R is full-extent (exempt
    NJ = _cdiv(R, TR)                                    # from the 8-divisibility rule)
    mask_needed = (HW_pad != HW) or (NJ * TR != R)

    kernel = functools.partial(dice_loss_kernel, hw=HW, mask_needed=mask_needed)

    partials = pl.pallas_call(
        kernel,
        out_shape=jax.ShapeDtypeStruct((B, NJ, 3 * NUM_CLASS, _LANES), jnp.float32),
        grid_spec=pltpu.PrefetchScalarGridSpec(
            num_scalar_prefetch=0,
            grid=(B, NJ),
            in_specs=[
                pl.BlockSpec((pl.Squeezed(), C, TR, _LANES), lambda b, j: (b, 0, j, 0)),
                pl.BlockSpec((pl.Squeezed(), 1, TR, _LANES), lambda b, j: (b, 0, j, 0)),
            ],
            out_specs=pl.BlockSpec((1, 1, 3 * NUM_CLASS, _LANES),
                                   lambda b, j: (b, j, 0, 0)),
        ),
        compiler_params=pltpu.CompilerParams(
            dimension_semantics=("parallel", "parallel"),   # megacore split on v7x
            vmem_limit_bytes=32 * 1024 * 1024,
        ),
    )(pred4, gt4)

    # Tiny epilogue (B*NJ*9*128 floats) in plain JAX: global sums + dice.
    sums = jnp.sum(partials, axis=(0, 1, 3))                 # (9,)
    intersect = sums[0:NUM_CLASS]
    z_sum = sums[NUM_CLASS:2 * NUM_CLASS]
    y_sum = sums[2 * NUM_CLASS:3 * NUM_CLASS]
    dice = (2.0 * intersect + SMOOTH) / (z_sum + y_sum + SMOOTH)
    return 1.0 - jnp.mean(dice)


def dice_loss_ref(pred, gt):
    """Pure-JAX reference mirroring the PyTorch forward()."""
    sm = jax.nn.softmax(pred.astype(jnp.float32), axis=1)
    loss = 0.0
    for i in range(NUM_CLASS):
        lab = (gt[:, 0] == i).astype(jnp.float32)
        intersect = jnp.sum(sm[:, i] * lab)
        z = jnp.sum(sm[:, i])
        y = jnp.sum(lab)
        loss = loss + (2.0 * intersect + SMOOTH) / (z + y + SMOOTH)
    return 1.0 - loss / NUM_CLASS


if __name__ == "__main__":
    key = jax.random.PRNGKey(0)
    kp, kg = jax.random.split(key)
    B, C, H, W = 2, NUM_CLASS, 16, 16
    pred = jax.random.normal(kp, (B, C, H, W), dtype=jnp.float32)
    gt = jax.random.randint(kg, (B, 1, H, W), 0, NUM_CLASS, dtype=jnp.int32)

    out = jax.block_until_ready(dice_loss(pred, gt))
    ref = dice_loss_ref(pred, gt)
    # Tolerance covers the EUP approximate reciprocal (pl.reciprocal(approx=True));
    # use approx=False for ~1e-6 agreement.
    assert jnp.allclose(out, ref, rtol=1e-3, atol=1e-3), (out, ref)

    # Ragged case: H*W not a multiple of 128 exercises the pad + mask path.
    kp2, kg2 = jax.random.split(kg)
    H2 = W2 = 20
    pred2 = jax.random.normal(kp2, (1, NUM_CLASS, H2, W2), dtype=jnp.float32)
    gt2 = jax.random.randint(kg2, (1, 1, H2, W2), 0, NUM_CLASS, dtype=jnp.int32)
    out2 = jax.block_until_ready(dice_loss(pred2, gt2))
    ref2 = dice_loss_ref(pred2, gt2)
    assert jnp.allclose(out2, ref2, rtol=1e-3, atol=1e-3), (out2, ref2)

    print("KERNEL_OK")
</pallas_src>

<mosaic_0001>
module attributes {stable_mosaic.version = 11 : i64} {
  func.func @dice_loss_kernel(%arg0: i32, %arg1: i32, %arg2: memref<1x3x2x128xf32, #tpu.memory_space<vmem>>, %arg3: memref<1x1x2x128xi32, #tpu.memory_space<vmem>>, %arg4: memref<1x1x9x128xf32, #tpu.memory_space<vmem>>) attributes {dimension_semantics = [#tpu.dimension_semantics<parallel>, #tpu.dimension_semantics<parallel>], iteration_bounds = array<i64: 2, 1>, scalar_prefetch = 0 : i64, scratch_operands = 0 : i64, tpu.core_type = #tpu.core_type<tc>, window_params = [{transform_indices = @transform_0, window_bounds = array<i64: 1, 3, 2, 128>}, {transform_indices = @transform_1, window_bounds = array<i64: 1, 1, 2, 128>}, {transform_indices = @transform_2, window_bounds = array<i64: 1, 1, 9, 128>}]} {
    %c0 = arith.constant 0 : index
    %c0_0 = arith.constant 0 : index
    %c0_1 = arith.constant 0 : index
    %c0_2 = arith.constant 0 : index
    %0 = vector.load %arg2[%c0, %c0_0, %c0_1, %c0_2] : memref<1x3x2x128xf32, #tpu.memory_space<vmem>>, vector<1x1x2x128xf32>
    %1 = vector.shape_cast %0 : vector<1x1x2x128xf32> to vector<2x128xf32>
    %c0_3 = arith.constant 0 : index
    %c1 = arith.constant 1 : index
    %c0_4 = arith.constant 0 : index
    %c0_5 = arith.constant 0 : index
    %2 = vector.load %arg2[%c0_3, %c1, %c0_4, %c0_5] : memref<1x3x2x128xf32, #tpu.memory_space<vmem>>, vector<1x1x2x128xf32>
    %3 = vector.shape_cast %2 : vector<1x1x2x128xf32> to vector<2x128xf32>
    %c0_6 = arith.constant 0 : index
    %c2 = arith.constant 2 : index
    %c0_7 = arith.constant 0 : index
    %c0_8 = arith.constant 0 : index
    %4 = vector.load %arg2[%c0_6, %c2, %c0_7, %c0_8] : memref<1x3x2x128xf32, #tpu.memory_space<vmem>>, vector<1x1x2x128xf32>
    %5 = vector.shape_cast %4 : vector<1x1x2x128xf32> to vector<2x128xf32>
    %c0_9 = arith.constant 0 : index
    %c0_10 = arith.constant 0 : index
    %c0_11 = arith.constant 0 : index
    %c0_12 = arith.constant 0 : index
    %6 = vector.load %arg3[%c0_9, %c0_10, %c0_11, %c0_12] : memref<1x1x2x128xi32, #tpu.memory_space<vmem>>, vector<1x1x2x128xi32>
    %7 = vector.shape_cast %6 : vector<1x1x2x128xi32> to vector<2x128xi32>
    %8 = arith.maximumf %3, %5 : vector<2x128xf32>
    %9 = arith.maximumf %1, %8 : vector<2x128xf32>
    %10 = arith.subf %1, %9 : vector<2x128xf32>
    %11 = math.exp %10 : vector<2x128xf32>
    %12 = arith.subf %3, %9 : vector<2x128xf32>
    %13 = math.exp %12 : vector<2x128xf32>
    %14 = arith.subf %5, %9 : vector<2x128xf32>
    %15 = math.exp %14 : vector<2x128xf32>
    %16 = arith.addf %11, %13 : vector<2x128xf32>
    %17 = arith.addf %16, %15 : vector<2x128xf32>
    %18 = tpu.reciprocal %17 {approx = true} : vector<2x128xf32> -> vector<2x128xf32>
    %19 = arith.mulf %11, %18 : vector<2x128xf32>
    %c0_i32 = arith.constant 0 : i32
    %20 = vector.broadcast %c0_i32 : i32 to vector<2x128xi32>
    %21 = arith.cmpi eq, %7, %20 : vector<2x128xi32>
    %cst = arith.constant 0.000000e+00 : f32
    %22 = vector.broadcast %cst : f32 to vector<2x128xf32>
    %23 = arith.select %21, %19, %22 : vector<2x128xi1>, vector<2x128xf32>
    %cst_13 = arith.constant dense<0.000000e+00> : vector<128xf32>
    %24 = vector.multi_reduction <add>, %23, %cst_13 [0] : vector<2x128xf32> to vector<128xf32>
    %25 = vector.shape_cast %24 : vector<128xf32> to vector<1x128xf32>
    %cst_14 = arith.constant dense<0.000000e+00> : vector<128xf32>
    %26 = vector.multi_reduction <add>, %19, %cst_14 [0] : vector<2x128xf32> to vector<128xf32>
    %27 = vector.shape_cast %26 : vector<128xf32> to vector<1x128xf32>
    %cst_15 = arith.constant 1.000000e+00 : f32
    %cst_16 = arith.constant 0.000000e+00 : f32
    %28 = vector.broadcast %cst_15 : f32 to vector<2x128xf32>
    %29 = vector.broadcast %cst_16 : f32 to vector<2x128xf32>
    %30 = arith.select %21, %28, %29 : vector<2x128xi1>, vector<2x128xf32>
    %cst_17 = arith.constant dense<0.000000e+00> : vector<128xf32>
    %31 = vector.multi_reduction <add>, %30, %cst_17 [0] : vector<2x128xf32> to vector<128xf32>
    %32 = vector.shape_cast %31 : vector<128xf32> to vector<1x128xf32>
    %33 = arith.mulf %13, %18 : vector<2x128xf32>
    %c1_i32 = arith.constant 1 : i32
    %34 = vector.broadcast %c1_i32 : i32 to vector<2x128xi32>
    %35 = arith.cmpi eq, %7, %34 : vector<2x128xi32>
    %cst_18 = arith.constant 0.000000e+00 : f32
    %36 = vector.broadcast %cst_18 : f32 to vector<2x128xf32>
    %37 = arith.select %35, %33, %36 : vector<2x128xi1>, vector<2x128xf32>
    %cst_19 = arith.constant dense<0.000000e+00> : vector<128xf32>
    %38 = vector.multi_reduction <add>, %37, %cst_19 [0] : vector<2x128xf32> to vector<128xf32>
    %39 = vector.shape_cast %38 : vector<128xf32> to vector<1x128xf32>
    %cst_20 = arith.constant dense<0.000000e+00> : vector<128xf32>
    %40 = vector.multi_reduction <add>, %33, %cst_20 [0] : vector<2x128xf32> to vector<128xf32>
    %41 = vector.shape_cast %40 : vector<128xf32> to vector<1x128xf32>
    %cst_21 = arith.constant 1.000000e+00 : f32
    %cst_22 = arith.constant 0.000000e+00 : f32
    %42 = vector.broadcast %cst_21 : f32 to vector<2x128xf32>
    %43 = vector.broadcast %cst_22 : f32 to vector<2x128xf32>
    %44 = arith.select %35, %42, %43 : vector<2x128xi1>, vector<2x128xf32>
    %cst_23 = arith.constant dense<0.000000e+00> : vector<128xf32>
    %45 = vector.multi_reduction <add>, %44, %cst_23 [0] : vector<2x128xf32> to vector<128xf32>
    %46 = vector.shape_cast %45 : vector<128xf32> to vector<1x128xf32>
    %47 = arith.mulf %15, %18 : vector<2x128xf32>
    %c2_i32 = arith.constant 2 : i32
    %48 = vector.broadcast %c2_i32 : i32 to vector<2x128xi32>
    %49 = arith.cmpi eq, %7, %48 : vector<2x128xi32>
    %cst_24 = arith.constant 0.000000e+00 : f32
    %50 = vector.broadcast %cst_24 : f32 to vector<2x128xf32>
    %51 = arith.select %49, %47, %50 : vector<2x128xi1>, vector<2x128xf32>
    %cst_25 = arith.constant dense<0.000000e+00> : vector<128xf32>
    %52 = vector.multi_reduction <add>, %51, %cst_25 [0] : vector<2x128xf32> to vector<128xf32>
    %53 = vector.shape_cast %52 : vector<128xf32> to vector<1x128xf32>
    %cst_26 = arith.constant dense<0.000000e+00> : vector<128xf32>
    %54 = vector.multi_reduction <add>, %47, %cst_26 [0] : vector<2x128xf32> to vector<128xf32>
    %55 = vector.shape_cast %54 : vector<128xf32> to vector<1x128xf32>
    %cst_27 = arith.constant 1.000000e+00 : f32
    %cst_28 = arith.constant 0.000000e+00 : f32
    %56 = vector.broadcast %cst_27 : f32 to vector<2x128xf32>
    %57 = vector.broadcast %cst_28 : f32 to vector<2x128xf32>
    %58 = arith.select %49, %56, %57 : vector<2x128xi1>, vector<2x128xf32>
    %cst_29 = arith.constant dense<0.000000e+00> : vector<128xf32>
    %59 = vector.multi_reduction <add>, %58, %cst_29 [0] : vector<2x128xf32> to vector<128xf32>
    %60 = vector.shape_cast %59 : vector<128xf32> to vector<1x128xf32>
    %61 = tpu.concatenate %25, %39, %53, %27, %41, %55, %32, %46, %60 in 0 : vector<1x128xf32>, vector<1x128xf32>, vector<1x128xf32>, vector<1x128xf32>, vector<1x128xf32>, vector<1x128xf32>, vector<1x128xf32>, vector<1x128xf32>, vector<1x128xf32> -> vector<9x128xf32>
    %c0_30 = arith.constant 0 : index
    %c0_31 = arith.constant 0 : index
    %c0_32 = arith.constant 0 : index
    %c0_33 = arith.constant 0 : index
    %62 = vector.load %arg4[%c0_30, %c0_31, %c0_32, %c0_33] : memref<1x1x9x128xf32, #tpu.memory_space<vmem>>, vector<1x1x9x128xf32>
    %63 = vector.shape_cast %62 : vector<1x1x9x128xf32> to vector<9x128xf32>
    %64 = vector.shape_cast %61 : vector<9x128xf32> to vector<1x1x9x128xf32>
    tpu.vector_store %arg4[%c0_30, %c0_31, %c0_32, %c0_33], %64 {strides = array<i32>} : memref<1x1x9x128xf32, #tpu.memory_space<vmem>>, vector<1x1x9x128xf32>,
    return
  }
  func.func @transform_0(%arg0: i32, %arg1: i32) -> (i32, i32, i32, i32) {
    %c0_i32 = arith.constant 0 : i32
    %c0_i32_0 = arith.constant 0 : i32
    %c0_i32_1 = arith.constant 0 : i32
    return %arg0, %c0_i32, %arg1, %c0_i32_0 : i32, i32, i32, i32
  }
  func.func @transform_1(%arg0: i32, %arg1: i32) -> (i32, i32, i32, i32) {
    %c0_i32 = arith.constant 0 : i32
    %c0_i32_0 = arith.constant 0 : i32
    %c0_i32_1 = arith.constant 0 : i32
    return %arg0, %c0_i32, %arg1, %c0_i32_0 : i32, i32, i32, i32
  }
  func.func @transform_2(%arg0: i32, %arg1: i32) -> (i32, i32, i32, i32) {
    %c0_i32 = arith.constant 0 : i32
    %c0_i32_0 = arith.constant 0 : i32
    %c0_i32_1 = arith.constant 0 : i32
    return %arg0, %arg1, %c0_i32, %c0_i32_0 : i32, i32, i32, i32
  }
}

</mosaic_0001>

<llo_original>
// kernel: tpu_custom_call.1
$region0: #{tpu_custom_call.1}
  #allocation0 [shape = 'u32[]', space=smem, size = 0x4, offset = 0x4, fixed_abs, tag = 'smem constant byte address 0x4 - core index']
  #allocation1 [shape = 'u32[144,128]{1,0:T(1,128)}', space=vmem, size = 0x12000, scoped, tag = 'internal scratch']
  %s0 = inlined_call_operand.hbm [shape: f32[2,3,2,128], index: 0, kind: input, shape index: {}]
  %s1 = inlined_call_operand.hbm [shape: s32[2,1,2,128], index: 1, kind: input, shape index: {}]
  %s2 = inlined_call_operand.vmem [shape: f32[2,1,9,128], index: 2, kind: output, shape index: {}]
  %s3 = sld [smem:[#allocation0]]
  $region49: #{tpu_custom_call.1} parent=0
    _
  %s5 = ssub.s32 1, %s3
  %s6 = scalar_select 0, %s5, %s3
  $region1: #{tpu_custom_call.1} parent=0
    #allocation2 [shape = 'u8[6144]{0}', space=vmem, size = 0x1800, scoped, tag = 'input window, operand 0']
    #allocation3 [shape = 's32[2]{0}', space=sflag, size = 0x8, scoped, tag = 'scoped memory for tpu_custom_call.1']
    #allocation4 [shape = 'u8[2048]{0}', space=vmem, size = 0x800, scoped, tag = 'input window, operand 1']
    #allocation5 [shape = 's32[2]{0}', space=sflag, size = 0x8, scoped, tag = 'scoped memory for tpu_custom_call.1']
    %7 = vsyncpa [#allocation3], 0
    %s8 = scalar_lea.sflag [#allocation3], 1
    %9 = vsyncpa %s8, 0
    %10 = vsyncpa [#allocation5], 0
    %s11 = scalar_lea.sflag [#allocation5], 1
    %12 = vsyncpa %s11, 0
    loop: start=0, step=1, limit=4
    $region2: #{tpu_custom_call.1} parent=1 // loop_pre_header
      _
    $region3: #{tpu_custom_call.1} parent=1 // loop_header
      %s14 = sphi 0, %s18
      %p15 = scmp.ge.s32.totalorder %s14, 4
      %s21 = sphi 0, %s33
      %s22 = sphi 0, %s29
      %s23 = sphi 0, %s21
      %s24 = sphi 0, %s22
      %s25 = sphi 0, %s23
      %s26 = sphi 0, %s24
      %s38 = sphi 0, %s40
      %s41 = sphi 0, %s38
      %s42 = sphi 0, %s41
      %s58 = sphi 0, %s42
      %s66 = sphi 0, %s68
      %s69 = sphi 0, %s66
      %s70 = sphi 0, %s69
      %s86 = sphi 0, %s70
      %s94 = sphi 0, %s96
      %s97 = sphi 0, %s94
      %s98 = sphi 0, %s97
      %s114 = sphi 0, %s98
    $region4: #{tpu_custom_call.1} parent=1 // loop_header_branch
      %17 = sbr.rel (%p15) target = $region8
    $region5: #{tpu_custom_call.1} parent=1 // loop_body
      %s19 = ssub.s32 %s14, 1
      %s20 = ssub.s32 %s14, 2
      %s27 = sadd.s32 1, %s22
      %p28 = scmp.ge.s32.totalorder %s27, 1
      %s29 = scalar_select %p28, 0, %s27
      %s30 = sadd.s32 1, %s21
      %s31 = scalar_select %p28, %s30, %s21
      %p32 = scmp.ge.s32.totalorder %s31, 2
      %s33 = scalar_select %p32, 0, %s31
      %s34 = ssub.s32 %s21, %s33
      %s35 = ssub.s32 %s22, %s29
      %s36 = sor.u32 %s34, %s35
      %p37 = scmp.eq.s32.totalorder %s36, 0
      %s39 = sadd.s32 %s38, 1
      %s40 = scalar_select %p37, %s38, %s39
      %p43 = pneg %p37
      %p44 = scmp.eq.s32.totalorder %s14, 1
      %p45 = por %p43, %p44
      %p46 = scmp.ne.s32.totalorder %s38, %s41
      %p47 = scmp.eq.s32.totalorder %s14, 0
      %p48 = por %p46, %p47
      %p49 = scmp.ne.s32.totalorder %s38, %s41
      %p50 = scmp.eq.s32.totalorder %s19, 1
      %p51 = por %p49, %p50
      %p52 = scmp.ne.s32.totalorder %s41, %s42
      %p53 = scmp.eq.s32.totalorder %s19, 0
      %p54 = por %p52, %p53
      %p55 = scmp.ne.s32.totalorder %s41, %s42
      %p56 = scmp.eq.s32.totalorder %s20, 1
      %p57 = por %p55, %p56
      %p59 = scmp.ne.s32.totalorder %s42, %s58
      %p60 = scmp.eq.s32.totalorder %s20, 0
      %p61 = por %p59, %p60
      %s62 = ssub.s32 %s21, %s33
      %s63 = ssub.s32 %s22, %s29
      %s64 = sor.u32 %s62, %s63
      %p65 = scmp.eq.s32.totalorder %s64, 0
      %s67 = sadd.s32 %s66, 1
      %s68 = scalar_select %p65, %s66, %s67
      %p71 = pneg %p65
      %p72 = scmp.eq.s32.totalorder %s14, 1
      %p73 = por %p71, %p72
      %p74 = scmp.ne.s32.totalorder %s66, %s69
      %p75 = scmp.eq.s32.totalorder %s14, 0
      %p76 = por %p74, %p75
      %p77 = scmp.ne.s32.totalorder %s66, %s69
      %p78 = scmp.eq.s32.totalorder %s19, 1
      %p79 = por %p77, %p78
      %p80 = scmp.ne.s32.totalorder %s69, %s70
      %p81 = scmp.eq.s32.totalorder %s19, 0
      %p82 = por %p80, %p81
      %p83 = scmp.ne.s32.totalorder %s69, %s70
      %p84 = scmp.eq.s32.totalorder %s20, 1
      %p85 = por %p83, %p84
      %p87 = scmp.ne.s32.totalorder %s70, %s86
      %p88 = scmp.eq.s32.totalorder %s20, 0
      %p89 = por %p87, %p88
      %s90 = ssub.s32 %s21, %s33
      %s91 = ssub.s32 %s22, %s29
      %s92 = sor.u32 %s90, %s91
      %p93 = scmp.eq.s32.totalorder %s92, 0
      %s95 = sadd.s32 %s94, 1
      %s96 = scalar_select %p93, %s94, %s95
      %p99 = pneg %p93
      %p100 = scmp.eq.s32.totalorder %s14, 1
      %p101 = por %p99, %p100
      %p102 = scmp.ne.s32.totalorder %s94, %s97
      %p103 = scmp.eq.s32.totalorder %s14, 0
      %p104 = por %p102, %p103
      %p105 = scmp.ne.s32.totalorder %s94, %s97
      %p106 = scmp.eq.s32.totalorder %s19, 1
      %p107 = por %p105, %p106
      %p108 = scmp.ne.s32.totalorder %s97, %s98
      %p109 = scmp.eq.s32.totalorder %s19, 0
      %p110 = por %p108, %p109
      %p111 = scmp.ne.s32.totalorder %s97, %s98
      %p112 = scmp.eq.s32.totalorder %s20, 1
      %p113 = por %p111, %p112
      %p115 = scmp.ne.s32.totalorder %s98, %s114
      %p116 = scmp.eq.s32.totalorder %s20, 0
      %p117 = por %p115, %p116
      %p118 = scmp.le.s32.totalorder 1, %s14
      %p119 = scmp.lt.s32.totalorder %s14, 3
      %p120 = pnand %p118, %p119
      %p121 = pneg %p120
      // Predicated region
      $region9: #{tpu_custom_call.1} parent=5 // pred_check
        _
      $region10: #{tpu_custom_call.1} parent=5 // pred_check_branch
        %123 = sbr.rel (%p120) target = $region12
      $region11: #{tpu_custom_call.1} parent=5 // pred_region
        %s124 = ssub.s32 %s14, 1
      $region12: #{tpu_custom_call.1} parent=5 // pred_fallthru
        _
      %p125 = scmp.lt.s32.totalorder %s14, 2
      // Predicated region
      $region13: #{tpu_custom_call.1} parent=5 // pred_check
        %p126 = pneg %p125
      $region14: #{tpu_custom_call.1} parent=5 // pred_check_branch
        %128 = sbr.rel (%p126) target = $region16
      $region15: #{tpu_custom_call.1} parent=5 // pred_region
        // Predicated region
        $region17: #{tpu_custom_call.1} parent=15 // pred_check
          %p129 = pneg %p48
        $region18: #{tpu_custom_call.1} parent=15 // pred_check_branch
          %131 = sbr.rel (%p129) target = $region20
        $region19: #{tpu_custom_call.1} parent=15 // pred_region
          %s132 = sand.u32 %s38, 1
          %s133 = scalar_lea.sflag [#allocation3], %s132
          %s134 = sand.u32 %s38, 1
          %s135 = smul.addr %s134, 6
          %s136 = scalar_lea.vmem [#allocation2], %s135
          %s138 = ssub.s32 96, 96
          %139 = vsyncadd %s133, %s138
          %s140 = smul.addr %s21, 3
          %s141 = sadd.s32 %s22, %s140
          %s142 = smul.addr %s141, 32
          %s143 = scalar_lea.hbm %s0, %s142
          %s144 = sshll.u32 %s136, 4
          %s145 = int_to_ptr.vmem [resolvable:$true] %s144
          %150 = dma.hbm_to_vmem [thread:$0]  %s143, 96, %s145, %s133, 32, 32, 2
        $region20: #{tpu_custom_call.1} parent=15 // pred_fallthru
          _
        // Predicated region
        $region21: #{tpu_custom_call.1} parent=15 // pred_check
          %p151 = pneg %p76
        $region22: #{tpu_custom_call.1} parent=15 // pred_check_branch
          %153 = sbr.rel (%p151) target = $region24
        $region23: #{tpu_custom_call.1} parent=15 // pred_region
          %s154 = sand.u32 %s66, 1
          %s155 = scalar_lea.sflag [#allocation5], %s154
          %s156 = sand.u32 %s66, 1
          %s157 = smul.addr %s156, 2
          %s158 = scalar_lea.vmem [#allocation4], %s157
          %s160 = ssub.s32 32, 32
          %161 = vsyncadd %s155, %s160
          %s162 = sadd.s32 %s22, %s21
          %s163 = smul.addr %s162, 32
          %s164 = scalar_lea.hbm %s1, %s163
          %s166 = sshll.u32 %s158, 4
          %s167 = int_to_ptr.vmem [resolvable:$true] %s166
          %169 = dma.hbm_to_vmem [thread:$0]  %s164, 32, %s167, %s155
        $region24: #{tpu_custom_call.1} parent=15 // pred_fallthru
          _
      $region16: #{tpu_custom_call.1} parent=5 // pred_fallthru
        _
      %p170 = scmp.le.s32.totalorder 1, %s14
      %p171 = scmp.lt.s32.totalorder %s14, 3
      %p172 = pnand %p170, %p171
      %p173 = pneg %p172
      // Predicated region
      $region25: #{tpu_custom_call.1} parent=5 // pred_check
        _
      $region26: #{tpu_custom_call.1} parent=5 // pred_check_branch
        %175 = sbr.rel (%p172) target = $region28
      $region27: #{tpu_custom_call.1} parent=5 // pred_region
        %s176 = ssub.s32 %s14, 1
        %s177 = sand.u32 %s41, 1
        %s178 = scalar_lea.sflag [#allocation3], %s177
        %s179 = sand.u32 %s41, 1
        %s180 = smul.addr %s179, 6
        %s181 = scalar_lea.vmem [#allocation2], %s180
        // Predicated region
        $region29: #{tpu_custom_call.1} parent=27 // pred_check
          %p182 = pneg %p54
        $region30: #{tpu_custom_call.1} parent=27 // pred_check_branch
          %184 = sbr.rel (%p182) target = $region32
        $region31: #{tpu_custom_call.1} parent=27 // pred_region
          %185 = dma.done %s178, 96
        $region32: #{tpu_custom_call.1} parent=27 // pred_fallthru
          _
        %s186 = sand.u32 %s69, 1
        %s187 = scalar_lea.sflag [#allocation5], %s186
        %s188 = sand.u32 %s69, 1
        %s189 = smul.addr %s188, 2
        %s190 = scalar_lea.vmem [#allocation4], %s189
        // Predicated region
        $region33: #{tpu_custom_call.1} parent=27 // pred_check
          %p191 = pneg %p82
        $region34: #{tpu_custom_call.1} parent=27 // pred_check_branch
          %193 = sbr.rel (%p191) target = $region36
        $region35: #{tpu_custom_call.1} parent=27 // pred_region
          %194 = dma.done %s187, 32
        $region36: #{tpu_custom_call.1} parent=27 // pred_fallthru
          _
        %s195 = sand.u32 %s41, 1
        %s196 = scalar_lea.sflag [#allocation3], %s195
        %s197 = sand.u32 %s41, 1
        %s198 = smul.addr %s197, 6
        %s199 = scalar_lea.vmem [#allocation2], %s198
        %p200 = pneg %p54
        %p201 = pneg %p51
        %s202 = sand.u32 %s69, 1
        %s203 = scalar_lea.sflag [#allocation5], %s202
        %s204 = sand.u32 %s69, 1
        %s205 = smul.addr %s204, 2
        %s206 = scalar_lea.vmem [#allocation4], %s205
        %p207 = pneg %p82
        %p208 = pneg %p79
        %p209 = pneg %p110
        %p210 = pneg %p107
        %p211 = scmp.lt.s32.totalorder %s23, 1
        %s212 = scalar_select %p211, %s23, 1
        %p213 = scmp.lt.s32.totalorder %s24, 0
        %s214 = scalar_select %p213, %s24, 0
        %s215 = smul.addr %s214, 2
        %s216 = smul.addr %s212, 2
        %s217 = sadd.s32 %s215, %s216
        %s218 = smul.addr %s217, 8
        %s219 = scalar_lea.vmem %s2, %s218
        %p220 = scmp.lt.s32.totalorder %s23, 1
        %s221 = scalar_select %p220, %s23, 1
        %p222 = scmp.lt.s32.totalorder %s24, 0
        %s223 = scalar_select %p222, %s24, 0
        %s224 = smul.addr %s223, 2
        %s225 = smul.addr %s221, 2
        %s226 = sadd.s32 %s224, %s225
        %s227 = smul.addr %s226, 8
        %s228 = scalar_lea.vmem %s2, %s227
        %v229 = vld [vmem:[%s181] sm:$0x3]
        %s230 = scalar_lea.vmem %s181, 2 [#allocation2]
        %v231 = vld [vmem:[%s230] sm:$0x3]
        %s232 = scalar_lea.vmem %s181, 4 [#allocation2]
        %v233 = vld [vmem:[%s232] sm:$0x3]
        %v234 = vld [vmem:[%s190] sm:$0x3]
        %v235 = vmax.f32 %v231, %v233
        %v236 = vmax.f32 %v229, %v235
        %v237 = vsub.f32 %v229, %v236
        %v238 = vmul.f32 %v237, 1.442695
        %v239 = vpow.pop %v238
        %v240 = vsub.f32 %v231, %v236
        %v241 = vmul.f32 %v240, 1.442695
        %v242 = vpow.pop %v241
        %v243 = vsub.f32 %v233, %v236
        %v244 = vmul.f32 %v243, 1.442695
        %v245 = vpow.pop %v244
        %v246 = vadd.f32 %v239, %v242
        %v247 = vadd.f32 %v246, %v245
        %v248 = vrcp.pop %v247
        %v249 = vmul.f32 %v239, %v248
        %vm250 = vcmp.eq.s32.totalorder %v234, 0
        %v251 = vsel %vm250, %v249, 0.0
        %vm252 = vcmask 1041408
        %v253 = vsel %vm252, %v251, 0.0
        %v254 = vrot.slane %v253, 4
        %v255 = vadd.f32 %v253, %v254
        %v256 = vrot.slane %v255, 2
        %v257 = vadd.f32 %v255, %v256
        %v258 = vrot.slane %v257, 1
        %v259 = vadd.f32 %v257, %v258
        %v260 = vsel %vm252, %v249, 0.0
        %v261 = vrot.slane %v260, 4
        %v262 = vadd.f32 %v260, %v261
        %v263 = vrot.slane %v262, 2
        %v264 = vadd.f32 %v262, %v263
        %v265 = vrot.slane %v264, 1
        %v266 = vadd.f32 %v264, %v265
        %v267 = vsel %vm250, 1.0, 0.0
        %v268 = vsel %vm252, %v267, 0.0
        %v269 = vrot.slane %v268, 4
        %v270 = vadd.f32 %v268, %v269
        %v271 = vrot.slane %v270, 2
        %v272 = vadd.f32 %v270, %v271
        %v273 = vrot.slane %v272, 1
        %v274 = vadd.f32 %v272, %v273
        %v275 = vmul.f32 %v242, %v248
        %vm276 = vcmp.eq.s32.totalorder %v234, 1
        %v277 = vsel %vm276, %v275, 0.0
        %v278 = vsel %vm252, %v277, 0.0
        %v279 = vrot.slane %v278, 4
        %v280 = vadd.f32 %v278, %v279
        %v281 = vrot.slane %v280, 2
        %v282 = vadd.f32 %v280, %v281
        %v283 = vrot.slane %v282, 1
        %v284 = vadd.f32 %v282, %v283
        %v285 = vsel %vm252, %v275, 0.0
        %v286 = vrot.slane %v285, 4
        %v287 = vadd.f32 %v285, %v286
        %v288 = vrot.slane %v287, 2
        %v289 = vadd.f32 %v287, %v288
        %v290 = vrot.slane %v289, 1
        %v291 = vadd.f32 %v289, %v290
        %v292 = vsel %vm276, 1.0, 0.0
        %v293 = vsel %vm252, %v292, 0.0
        %v294 = vrot.slane %v293, 4
        %v295 = vadd.f32 %v293, %v294
        %v296 = vrot.slane %v295, 2
        %v297 = vadd.f32 %v295, %v296
        %v298 = vrot.slane %v297, 1
        %v299 = vadd.f32 %v297, %v298
        %v300 = vmul.f32 %v245, %v248
        %vm301 = vcmp.eq.s32.totalorder %v234, 2
        %v302 = vsel %vm301, %v300, 0.0
        %v303 = vsel %vm252, %v302, 0.0
        %v304 = vrot.slane %v303, 4
        %v305 = vadd.f32 %v303, %v304
        %v306 = vrot.slane %v305, 2
        %v307 = vadd.f32 %v305, %v306
        %v308 = vrot.slane %v307, 1
        %v309 = vadd.f32 %v307, %v308
        %v310 = vsel %vm252, %v300, 0.0
        %v311 = vrot.slane %v310, 4
        %v312 = vadd.f32 %v310, %v311
        %v313 = vrot.slane %v312, 2
        %v314 = vadd.f32 %v312, %v313
        %v315 = vrot.slane %v314, 1
        %v316 = vadd.f32 %v314, %v315
        %v317 = vsel %vm301, 1.0, 0.0
        %v318 = vsel %vm252, %v317, 0.0
        %v319 = vrot.slane %v318, 4
        %v320 = vadd.f32 %v318, %v319
        %v321 = vrot.slane %v320, 2
        %v322 = vadd.f32 %v320, %v321
        %v323 = vrot.slane %v322, 1
        %v324 = vadd.f32 %v322, %v323
        %vm325 = vcmask 1040384
        %v326 = vsel %vm325, %v259, %v284
        %v327 = vsel %vm252, %v326, %v309
        %vm328 = vcmask 1042432
        %v329 = vsel %vm328, %v327, %v266
        %vm330 = vcmask 1043456
        %v331 = vsel %vm330, %v329, %v291
        %vm332 = vcmask 1044480
        %v333 = vsel %vm332, %v331, %v316
        %vm334 = vcmask 1045504
        %v335 = vsel %vm334, %v333, %v274
        %vm336 = vcmask 1046528
        %v337 = vsel %vm336, %v335, %v299
        %338 = vst [vmem:[%s228] sm:$0xff] %v337
        %339 = vst [vmem:[%s228 + $0x8] sm:$0x1] %v324
        %p340 = scmp.lt.s32.totalorder %s23, 1
        %s341 = scalar_select %p340, %s23, 1
        %p342 = scmp.lt.s32.totalorder %s24, 0
        %s343 = scalar_select %p342, %s24, 0
        %s344 = smul.addr %s343, 2
        %s345 = smul.addr %s341, 2
        %s346 = sadd.s32 %s344, %s345
        %s347 = smul.addr %s346, 8
        %s348 = scalar_lea.vmem %s2, %s347
        // Predicated region
        $region37: #{tpu_custom_call.1} parent=27 // pred_check
          %p349 = pneg %p107
        $region38: #{tpu_custom_call.1} parent=27 // pred_check_branch
          %351 = sbr.rel (%p349) target = $region40
        $region39: #{tpu_custom_call.1} parent=27 // pred_region
          _
        $region40: #{tpu_custom_call.1} parent=27 // pred_fallthru
          _
      $region28: #{tpu_custom_call.1} parent=5 // pred_fallthru
        _
      %p352 = scmp.le.s32.totalorder 2, %s14
      // Predicated region
      $region41: #{tpu_custom_call.1} parent=5 // pred_check
        %p353 = pneg %p352
      $region42: #{tpu_custom_call.1} parent=5 // pred_check_branch
        %355 = sbr.rel (%p353) target = $region44
      $region43: #{tpu_custom_call.1} parent=5 // pred_region
        %s356 = ssub.s32 %s14, 2
        // Predicated region
        $region45: #{tpu_custom_call.1} parent=43 // pred_check
          %p357 = pneg %p113
        $region46: #{tpu_custom_call.1} parent=43 // pred_check_branch
          %359 = sbr.rel (%p357) target = $region48
        $region47: #{tpu_custom_call.1} parent=43 // pred_region
          %p360 = scmp.lt.s32.totalorder %s25, 1
          %s361 = scalar_select %p360, %s25, 1
          %p362 = scmp.lt.s32.totalorder %s26, 0
          %s363 = scalar_select %p362, %s26, 0
          %s364 = smul.addr %s363, 2
          %s365 = smul.addr %s361, 2
          %s366 = sadd.s32 %s364, %s365
          %s367 = smul.addr %s366, 8
          %s368 = scalar_lea.vmem %s2, %s367
        $region48: #{tpu_custom_call.1} parent=43 // pred_fallthru
          _
      $region44: #{tpu_custom_call.1} parent=5 // pred_fallthru
        _
    $region6: #{tpu_custom_call.1} parent=1 // loop_footer
      %s18 = sadd.s32 1, %s14
    $region7: #{tpu_custom_call.1} parent=1 // loop_footer_branch
      %13 = sbr.rel target = $region3
    $region8: #{tpu_custom_call.1} parent=1 // loop_exit
      _
    %369 = vsyncpa [#allocation3], 1
    %s370 = scalar_lea.sflag [#allocation3], 1
    %371 = vsyncpa %s370, 1
    %372 = vsyncpa [#allocation5], 1
    %s373 = scalar_lea.sflag [#allocation5], 1
    %374 = vsyncpa %s373, 1

</llo_original>
